<compile_context>
chip_gen: v7x
topology: tpu7x:2x2x1
jax: 0.10.0
libtpu: 0.0.40
codegen_flags: <defaults>
</compile_context>

<pallas_src>
import functools
import math

import jax
import jax.numpy as jnp
import numpy as np
from jax.experimental import pallas as pl
from jax.experimental.pallas import tpu as pltpu

DEFAULT_GAMMA = 2.0
DEFAULT_ALPHA = 0.25
# The reference forward hard-codes background class 0 (column 0 of the onehot is dropped).


def _cdiv(a, b):
    return (a + b - 1) // b


def _round_up(v, m):
    return ((v + m - 1) // m) * m


def _focal_kernel(pred_ref, tgt_ref, out_ref, loss_acc, cnt_acc, *,
                  gamma, alpha, num_fg, flat_layout, rows_total, need_row_mask):
    """grid = (n_split, batch, n_steps); reduction (row) axis last."""
    n = pl.program_id(2)
    steps = pl.num_programs(2)

    @pl.when(n == 0)
    def _init():
        loss_acc[...] = jnp.zeros_like(loss_acc)
        cnt_acc[...] = jnp.zeros_like(cnt_acc)

    x = pred_ref[...].astype(jnp.float32)      # (1, TR, L) logits
    t = tgt_ref[...].astype(jnp.int32)         # (1, TR, L) flat layout / (1, TR, 1) natural

    # Class id per lane: natural layout -> lane index, flat layout -> lane % C.
    cls = jax.lax.broadcasted_iota(jnp.int32, x.shape, dimension=2)
    if flat_layout:
        cls = cls % num_fg

    # Label c in [1, C] is foreground class c (column c-1); -1 never matches, so no relabel.
    onehot = (t - 1) == cls
    valid = t > -1                             # label -1 is ignored

    if need_row_mask:                          # ragged last tile: mask rows past rows_total
        tr = x.shape[1]
        row = jax.lax.broadcasted_iota(jnp.int32, (1, tr, 1), dimension=1)
        row_start = (pl.program_id(0) * steps + n) * tr
        valid = jnp.logical_and(valid, (row + row_start) < rows_total)

    # Stable BCE-with-logits + focal weight; EUP chain is exp -> log1p -> reciprocal.
    e = jnp.exp(-jnp.abs(x))
    log_term = jnp.log1p(e)                    # log(1 + exp(-|x|)), accurate for large |x|
    s = 1.0 / (1.0 + e)                        # sigmoid(|x|) (exact recip keeps tolerance headroom)
    p = jnp.where(x >= 0.0, s, 1.0 - s)        # sigmoid(x)
    one_m_p = 1.0 - p

    if gamma == 2.0:                           # fast path: VPU squares, no transcendental pow
        pow_1mp = one_m_p * one_m_p
        pow_p = p * p
    else:                                      # general gamma fallback
        pow_1mp = jnp.power(one_m_p, gamma)
        pow_p = jnp.power(p, gamma)

    relu_x = jnp.maximum(x, 0.0)
    loss_pos = (alpha * pow_1mp) * ((relu_x - x) + log_term)   # onehot == 1 branch
    loss_neg = ((1.0 - alpha) * pow_p) * (relu_x + log_term)   # onehot == 0 branch
    elem = jnp.where(valid, jnp.where(onehot, loss_pos, loss_neg), 0.0)

    # Exactly one lane matches per positive (label in [1, C]) point -> foreground count.
    pos = jnp.logical_and(onehot, valid)

    # Per-step full reduce on the XLU into tiny VMEM scalars (no full-tile accumulator).
    loss_acc[...] += jnp.sum(elem)
    cnt_acc[...] += jnp.sum(pos.astype(jnp.float32))

    @pl.when(n == steps - 1)
    def _finalize():
        half = jax.lax.broadcasted_iota(jnp.int32, out_ref.shape, dimension=2)
        out_ref[...] = jnp.where(half == 0, loss_acc[...], cnt_acc[...])


def _vmem_limit_bytes():
    """Scoped VMEM limit derived from the chip (64 MiB v7x, 128 MiB v5e/v6e)."""
    try:
        cap = int(pltpu.get_tpu_info().vmem_capacity_bytes)
    except Exception:
        cap = 64 * 1024 * 1024       # conservative fallback (v7x per-TensorCore VMEM)
    return max((cap * 3) // 4, 16 * 1024 * 1024)


def _pick_group(n_points, num_fg):
    """Points packed per lane-row for the small-C flat layout."""
    need = 128 // math.gcd(128, num_fg)        # smallest g with (g * C) % 128 == 0
    if n_points % need == 0:
        return need
    best = 1
    limit = max(1, 1024 // num_fg)
    for cand in range(1, min(n_points, limit) + 1):
        if n_points % cand == 0:
            best = cand
    return best


def _pick_tile_rows(rows_total, lane_width, tgt_lane_width, tgt_itemsize, vmem_limit):
    """Largest row tile that keeps double-buffered inputs inside the VMEM budget."""
    lane_pad = _round_up(lane_width, 128)
    tgt_pad = _round_up(tgt_lane_width, 128)
    per_row = 2 * (lane_pad * 4 + tgt_pad * tgt_itemsize)   # double-buffered pred + target
    budget = max(vmem_limit // 2, 2 * 1024 * 1024)
    tile = max(8, budget // per_row)
    if rows_total >= 32:
        # keep >= ~4 grid steps so the pipeline (and a v7x 2-way N split) has work
        tile = min(tile, _round_up(_cdiv(rows_total, 4), 8))
    if tile >= rows_total:
        return rows_total
    tile = max(8, (tile // 8) * 8)
    for cand in range(tile, max(8, tile - 256) - 1, -8):    # prefer a divisor -> no ragged tail
        if cand >= 8 and rows_total % cand == 0:
            return cand
    return tile                                             # ragged tail handled by row mask


def sigmoid_focal_loss(pred, target, *, gamma=DEFAULT_GAMMA, alpha=DEFAULT_ALPHA,
                       tile_rows=None, n_splits=None):
    """pred: (B, N, C) float logits (f32 or bf16); target: (B, N) int labels in [-1, C]."""
    B, N, C = pred.shape
    target = target.astype(jnp.int32)

    flat_layout = C < 64
    if flat_layout:
        # Small class count: lane-dense repack (free reshape of pred).  Labels are
        # expanded to per-(point, class) int8 — a small extra HBM pass (~NC bytes),
        # far cheaper than the old f32 minor-dim transpose of pred.
        # TODO(synk): an in-kernel label broadcast (MXU one-hot matmul) would remove
        # even this extra pass; kept in the wrapper for lowering robustness.
        g = _pick_group(N, C)
        rows_total = N // g
        lane_width = g * C
        x_in = pred.reshape(B, rows_total, lane_width)
        t_in = jnp.broadcast_to(target.astype(jnp.int8)[:, :, None],
                                (B, N, C)).reshape(B, rows_total, lane_width)
        tgt_lanes, tgt_itemsize = lane_width, 1
    else:
        # Large class count: natural (B, N, C) layout, block contiguous in HBM.
        rows_total = N
        lane_width = C
        x_in = pred
        t_in = target.reshape(B, N, 1)
        tgt_lanes, tgt_itemsize = 1, 4

    vmem_limit = _vmem_limit_bytes()
    if tile_rows is None:
        tile_rows = _pick_tile_rows(rows_total, lane_width, tgt_lanes, tgt_itemsize, vmem_limit)
    tile_rows = min(int(tile_rows), rows_total)

    steps_total = _cdiv(rows_total, tile_rows)
    if n_splits is None:
        n_splits = 2 if (steps_total >= 2 and steps_total % 2 == 0) else 1
    if steps_total % n_splits != 0:
        n_splits = 1
    steps_per_split = steps_total // n_splits
    need_row_mask = steps_total * tile_rows != rows_total

    kernel = functools.partial(
        _focal_kernel,
        gamma=float(gamma), alpha=float(alpha), num_fg=int(C),
        flat_layout=bool(flat_layout), rows_total=int(rows_total),
        need_row_mask=bool(need_row_mask))

    def in_map(s, b, n):
        return (b, s * steps_per_split + n, 0)

    out = pl.pallas_call(
        kernel,
        out_shape=jax.ShapeDtypeStruct((n_splits, B, 2, 128), jnp.float32),
        grid_spec=pltpu.PrefetchScalarGridSpec(
            num_scalar_prefetch=0,
            grid=(n_splits, B, steps_per_split),
            in_specs=[
                pl.BlockSpec((1, tile_rows, lane_width), in_map),
                pl.BlockSpec((1, tile_rows, tgt_lanes), in_map),
            ],
            out_specs=pl.BlockSpec((1, 1, 2, 128), lambda s, b, n: (s, b, 0, 0)),
            scratch_shapes=[
                pltpu.VMEM((1, 1), jnp.float32),   # loss accumulator
                pltpu.VMEM((1, 1), jnp.float32),   # positive-count accumulator
            ],
        ),
        compiler_params=pltpu.CompilerParams(
            dimension_semantics=("parallel", "parallel", "arbitrary"),
            vmem_limit_bytes=int(vmem_limit),
        ),
    )(x_in, t_in)

    loss_sum = jnp.sum(out[:, :, 0, 0], axis=0)   # (B,)  combine the per-core N splits
    pos_cnt = jnp.sum(out[:, :, 1, 0], axis=0)    # (B,)
    avg_factor = jnp.maximum(pos_cnt, 1.0)
    return jnp.mean(loss_sum / avg_factor)


def _reference(pred, target, gamma=DEFAULT_GAMMA, alpha=DEFAULT_ALPHA):
    """Pure-JAX reference mirroring the PyTorch forward."""
    B, N, C = pred.shape
    p = jax.nn.sigmoid(pred)
    mask = target > -1
    new_t = target * mask.astype(target.dtype)
    onehot_full = jax.nn.one_hot(new_t, C + 1, dtype=jnp.float32)  # (B, N, C+1)
    onehot = onehot_full[:, :, 1:]
    mask_f = mask[:, :, None].astype(jnp.float32)
    weight = (alpha * (1 - p) ** gamma * onehot
              + (1 - alpha) * p ** gamma * (1 - onehot)) * mask_f
    bce = jnp.maximum(pred, 0.0) - pred * onehot + jnp.log1p(jnp.exp(-jnp.abs(pred)))
    loss = (bce * weight).sum(axis=(1, 2))
    avg = jnp.maximum(jnp.sum((target > 0).astype(jnp.float32), axis=1), 1.0)
    return jnp.mean(loss / avg)


if __name__ == "__main__":
    key = jax.random.PRNGKey(0)

    configs = [
        dict(B=2, N=8, C=4),        # spec-scale smoke test (small-C flat path, single block)
        dict(B=2, N=64, C=80),      # natural layout (C >= 64), multi-step + 2-way split
        dict(B=3, N=320, C=100),    # natural layout, larger rows, auto-tiled
        dict(B=2, N=4096, C=4),     # flat path: g=32 point-groups, multi-step + 2-way split
    ]

    for i, cfg in enumerate(configs):
        k1, k2 = jax.random.split(jax.random.fold_in(key, i))
        B, N, C = cfg["B"], cfg["N"], cfg["C"]
        pred = jax.random.normal(k1, (B, N, C), dtype=jnp.float32) * 2.0
        # labels in [-1, C]: -1 ignored, 0 background, 1..C foreground
        target = jax.random.randint(k2, (B, N), -1, C + 1, dtype=jnp.int32)

        out = sigmoid_focal_loss(pred, target)
        out = jax.block_until_ready(out)

        ref = _reference(pred, target)
        np.testing.assert_allclose(np.asarray(out), np.asarray(ref), rtol=1e-4, atol=1e-5)

    print("KERNEL_OK")
</pallas_src>

<mosaic_0001>
module attributes {stable_mosaic.version = 11 : i64} {
  func.func @_focal_kernel(%arg0: i32, %arg1: i32, %arg2: i32, %arg3: memref<1x1x32xf32, #tpu.memory_space<vmem>>, %arg4: memref<1x1x32xi8, #tpu.memory_space<vmem>>, %arg5: memref<1x1x2x128xf32, #tpu.memory_space<vmem>>, %arg6: memref<1x1xf32, #tpu.memory_space<vmem>>, %arg7: memref<1x1xf32, #tpu.memory_space<vmem>>) attributes {dimension_semantics = [#tpu.dimension_semantics<parallel>, #tpu.dimension_semantics<parallel>, #tpu.dimension_semantics<arbitrary>], iteration_bounds = array<i64: 1, 2, 1>, scalar_prefetch = 0 : i64, scratch_operands = 2 : i64, tpu.core_type = #tpu.core_type<tc>, window_params = [{transform_indices = @transform_0, window_bounds = array<i64: 1, 1, 32>}, {transform_indices = @transform_1, window_bounds = array<i64: 1, 1, 32>}, {transform_indices = @transform_2, window_bounds = array<i64: 1, 1, 2, 128>}]} {
    %c0_i32 = arith.constant 0 : i32
    %0 = arith.cmpi eq, %arg2, %c0_i32 : i32
    %1 = arith.extui %0 : i1 to i32
    %c0_i32_0 = arith.constant 0 : i32
    %2 = arith.cmpi ne, %1, %c0_i32_0 : i32
    scf.if %2 {
      %cst_32 = arith.constant 0.000000e+00 : f32
      %82 = vector.broadcast %cst_32 : f32 to vector<1x1xf32>
      %c0_33 = arith.constant 0 : index
      %c0_34 = arith.constant 0 : index
      %83 = vector.load %arg6[%c0_33, %c0_34] : memref<1x1xf32, #tpu.memory_space<vmem>>, vector<1x1xf32>
      tpu.vector_store %arg6[%c0_33, %c0_34], %82 {strides = array<i32>} : memref<1x1xf32, #tpu.memory_space<vmem>>, vector<1x1xf32>,
      %cst_35 = arith.constant 0.000000e+00 : f32
      %84 = vector.broadcast %cst_35 : f32 to vector<1x1xf32>
      %c0_36 = arith.constant 0 : index
      %c0_37 = arith.constant 0 : index
      %85 = vector.load %arg7[%c0_36, %c0_37] : memref<1x1xf32, #tpu.memory_space<vmem>>, vector<1x1xf32>
      tpu.vector_store %arg7[%c0_36, %c0_37], %84 {strides = array<i32>} : memref<1x1xf32, #tpu.memory_space<vmem>>, vector<1x1xf32>,
    } else {
    }
    %c0 = arith.constant 0 : index
    %c0_1 = arith.constant 0 : index
    %c0_2 = arith.constant 0 : index
    %3 = vector.load %arg3[%c0, %c0_1, %c0_2] : memref<1x1x32xf32, #tpu.memory_space<vmem>>, vector<1x1x32xf32>
    %c0_3 = arith.constant 0 : index
    %c0_4 = arith.constant 0 : index
    %c0_5 = arith.constant 0 : index
    %4 = vector.load %arg4[%c0_3, %c0_4, %c0_5] : memref<1x1x32xi8, #tpu.memory_space<vmem>>, vector<1x1x32xi8>
    %5 = arith.extsi %4 : vector<1x1x32xi8> to vector<1x1x32xi32>
    %6 = tpu.iota {dimensions = array<i32: 2>} : vector<1x1x32xi32>
    %c4_i32 = arith.constant 4 : i32
    %c0_i32_6 = arith.constant 0 : i32
    %7 = arith.cmpi eq, %c4_i32, %c0_i32_6 : i32
    %c1_i32 = arith.constant 1 : i32
    %8 = arith.select %7, %c1_i32, %c4_i32 : i32
    %9 = vector.broadcast %8 : i32 to vector<1x1x32xi32>
    %10 = arith.remsi %6, %9 : vector<1x1x32xi32>
    %c0_i32_7 = arith.constant 0 : i32
    %11 = vector.broadcast %c0_i32_7 : i32 to vector<1x1x32xi32>
    %12 = arith.cmpi ne, %10, %11 : vector<1x1x32xi32>
    %c0_i32_8 = arith.constant 0 : i32
    %13 = vector.broadcast %c0_i32_8 : i32 to vector<1x1x32xi32>
    %14 = arith.cmpi slt, %10, %13 : vector<1x1x32xi32>
    %c0_i32_9 = arith.constant 0 : i32
    %15 = arith.cmpi slt, %8, %c0_i32_9 : i32
    %16 = vector.broadcast %15 : i1 to vector<1x1x32xi1>
    %17 = vector.broadcast %16 : vector<1x1x32xi1> to vector<1x1x32xi1>
    %18 = arith.xori %14, %17 : vector<1x1x32xi1>
    %19 = arith.andi %18, %12 : vector<1x1x32xi1>
    %20 = vector.broadcast %8 : i32 to vector<1x1x32xi32>
    %21 = arith.addi %10, %20 : vector<1x1x32xi32>
    %22 = arith.select %19, %21, %10 : vector<1x1x32xi1>, vector<1x1x32xi32>
    %c1_i32_10 = arith.constant 1 : i32
    %23 = vector.broadcast %c1_i32_10 : i32 to vector<1x1x32xi32>
    %24 = arith.subi %5, %23 : vector<1x1x32xi32>
    %25 = arith.cmpi eq, %24, %22 : vector<1x1x32xi32>
    %c-1_i32 = arith.constant -1 : i32
    %26 = vector.broadcast %c-1_i32 : i32 to vector<1x1x32xi32>
    %27 = arith.cmpi sgt, %5, %26 : vector<1x1x32xi32>
    %28 = math.absf %3 : vector<1x1x32xf32>
    %cst = arith.constant 0.000000e+00 : f32
    %29 = vector.broadcast %cst : f32 to vector<1x1x32xf32>
    %30 = arith.subf %29, %28 : vector<1x1x32xf32>
    %31 = math.exp %30 : vector<1x1x32xf32>
    %32 = math.log1p %31 : vector<1x1x32xf32>
    %cst_11 = arith.constant 1.000000e+00 : f32
    %33 = vector.broadcast %cst_11 : f32 to vector<1x1x32xf32>
    %34 = arith.addf %33, %31 : vector<1x1x32xf32>
    %cst_12 = arith.constant 1.000000e+00 : f32
    %35 = vector.broadcast %cst_12 : f32 to vector<1x1x32xf32>
    %36 = arith.divf %35, %34 : vector<1x1x32xf32>
    %cst_13 = arith.constant 0.000000e+00 : f32
    %37 = vector.broadcast %cst_13 : f32 to vector<1x1x32xf32>
    %38 = arith.cmpf oge, %3, %37 : vector<1x1x32xf32>
    %cst_14 = arith.constant 1.000000e+00 : f32
    %39 = vector.broadcast %cst_14 : f32 to vector<1x1x32xf32>
    %40 = arith.subf %39, %36 : vector<1x1x32xf32>
    %41 = arith.select %38, %36, %40 : vector<1x1x32xi1>, vector<1x1x32xf32>
    %cst_15 = arith.constant 1.000000e+00 : f32
    %42 = vector.broadcast %cst_15 : f32 to vector<1x1x32xf32>
    %43 = arith.subf %42, %41 : vector<1x1x32xf32>
    %44 = arith.mulf %43, %43 : vector<1x1x32xf32>
    %45 = arith.mulf %41, %41 : vector<1x1x32xf32>
    %cst_16 = arith.constant 0.000000e+00 : f32
    %46 = vector.broadcast %cst_16 : f32 to vector<1x1x32xf32>
    %47 = arith.maximumf %3, %46 : vector<1x1x32xf32>
    %cst_17 = arith.constant 2.500000e-01 : f32
    %48 = vector.broadcast %cst_17 : f32 to vector<1x1x32xf32>
    %49 = arith.mulf %48, %44 : vector<1x1x32xf32>
    %50 = arith.subf %47, %3 : vector<1x1x32xf32>
    %51 = arith.addf %50, %32 : vector<1x1x32xf32>
    %52 = arith.mulf %49, %51 : vector<1x1x32xf32>
    %cst_18 = arith.constant 7.500000e-01 : f32
    %53 = vector.broadcast %cst_18 : f32 to vector<1x1x32xf32>
    %54 = arith.mulf %53, %45 : vector<1x1x32xf32>
    %55 = arith.addf %47, %32 : vector<1x1x32xf32>
    %56 = arith.mulf %54, %55 : vector<1x1x32xf32>
    %57 = arith.select %25, %52, %56 : vector<1x1x32xi1>, vector<1x1x32xf32>
    %cst_19 = arith.constant 0.000000e+00 : f32
    %58 = vector.broadcast %cst_19 : f32 to vector<1x1x32xf32>
    %59 = arith.select %27, %57, %58 : vector<1x1x32xi1>, vector<1x1x32xf32>
    %60 = arith.andi %25, %27 : vector<1x1x32xi1>
    %c0_20 = arith.constant 0 : index
    %c0_21 = arith.constant 0 : index
    %61 = vector.load %arg6[%c0_20, %c0_21] : memref<1x1xf32, #tpu.memory_space<vmem>>, vector<1x1xf32>
    %62 = vector.shape_cast %59 : vector<1x1x32xf32> to vector<1x1x1x32xf32>
    %cst_22 = arith.constant dense<0.000000e+00> : vector<1xf32>
    %63 = vector.multi_reduction <add>, %62, %cst_22 [1, 2, 3] : vector<1x1x1x32xf32> to vector<1xf32>
    %64 = vector.shape_cast %63 : vector<1xf32> to vector<1x1x1x1xf32>
    %65 = vector.extract %64[0, 0, 0, 0] : f32 from vector<1x1x1x1xf32>
    %66 = vector.broadcast %65 : f32 to vector<1x1xf32>
    %67 = arith.addf %61, %66 : vector<1x1xf32>
    %c0_23 = arith.constant 0 : index
    %c0_24 = arith.constant 0 : index
    %68 = vector.load %arg6[%c0_23, %c0_24] : memref<1x1xf32, #tpu.memory_space<vmem>>, vector<1x1xf32>
    tpu.vector_store %arg6[%c0_23, %c0_24], %67 {strides = array<i32>} : memref<1x1xf32, #tpu.memory_space<vmem>>, vector<1x1xf32>,
    %c0_25 = arith.constant 0 : index
    %c0_26 = arith.constant 0 : index
    %69 = vector.load %arg7[%c0_25, %c0_26] : memref<1x1xf32, #tpu.memory_space<vmem>>, vector<1x1xf32>
    %70 = arith.extui %60 : vector<1x1x32xi1> to vector<1x1x32xi32>
    %71 = arith.sitofp %70 : vector<1x1x32xi32> to vector<1x1x32xf32>
    %72 = vector.shape_cast %71 : vector<1x1x32xf32> to vector<1x1x1x32xf32>
    %cst_27 = arith.constant dense<0.000000e+00> : vector<1xf32>
    %73 = vector.multi_reduction <add>, %72, %cst_27 [1, 2, 3] : vector<1x1x1x32xf32> to vector<1xf32>
    %74 = vector.shape_cast %73 : vector<1xf32> to vector<1x1x1x1xf32>
    %75 = vector.extract %74[0, 0, 0, 0] : f32 from vector<1x1x1x1xf32>
    %76 = vector.broadcast %75 : f32 to vector<1x1xf32>
    %77 = arith.addf %69, %76 : vector<1x1xf32>
    %c0_28 = arith.constant 0 : index
    %c0_29 = arith.constant 0 : index
    %78 = vector.load %arg7[%c0_28, %c0_29] : memref<1x1xf32, #tpu.memory_space<vmem>>, vector<1x1xf32>
    tpu.vector_store %arg7[%c0_28, %c0_29], %77 {strides = array<i32>} : memref<1x1xf32, #tpu.memory_space<vmem>>, vector<1x1xf32>,
    %c0_i32_30 = arith.constant 0 : i32
    %79 = arith.cmpi eq, %arg2, %c0_i32_30 : i32
    %80 = arith.extui %79 : i1 to i32
    %c0_i32_31 = arith.constant 0 : i32
    %81 = arith.cmpi ne, %80, %c0_i32_31 : i32
    scf.if %81 {
      %82 = tpu.iota {dimensions = array<i32: 2>} : vector<1x1x2x128xi32>
      %c0_i32_32 = arith.constant 0 : i32
      %83 = vector.broadcast %c0_i32_32 : i32 to vector<1x1x2x128xi32>
      %84 = arith.cmpi eq, %82, %83 : vector<1x1x2x128xi32>
      %c0_33 = arith.constant 0 : index
      %c0_34 = arith.constant 0 : index
      %85 = vector.load %arg6[%c0_33, %c0_34] : memref<1x1xf32, #tpu.memory_space<vmem>>, vector<1x1xf32>
      %c0_35 = arith.constant 0 : index
      %c0_36 = arith.constant 0 : index
      %86 = vector.load %arg7[%c0_35, %c0_36] : memref<1x1xf32, #tpu.memory_space<vmem>>, vector<1x1xf32>
      %87 = vector.shape_cast %85 : vector<1x1xf32> to vector<1x1x1x1xf32>
      %88 = vector.broadcast %87 : vector<1x1x1x1xf32> to vector<1x1x2x128xf32>
      %89 = vector.shape_cast %86 : vector<1x1xf32> to vector<1x1x1x1xf32>
      %90 = vector.broadcast %89 : vector<1x1x1x1xf32> to vector<1x1x2x128xf32>
      %91 = arith.select %84, %88, %90 : vector<1x1x2x128xi1>, vector<1x1x2x128xf32>
      %c0_37 = arith.constant 0 : index
      %c0_38 = arith.constant 0 : index
      %c0_39 = arith.constant 0 : index
      %c0_40 = arith.constant 0 : index
      %92 = vector.load %arg5[%c0_37, %c0_38, %c0_39, %c0_40] : memref<1x1x2x128xf32, #tpu.memory_space<vmem>>, vector<1x1x2x128xf32>
      tpu.vector_store %arg5[%c0_37, %c0_38, %c0_39, %c0_40], %91 {strides = array<i32>} : memref<1x1x2x128xf32, #tpu.memory_space<vmem>>, vector<1x1x2x128xf32>,
    } else {
    }
    return
  }
  func.func @transform_0(%arg0: i32, %arg1: i32, %arg2: i32) -> (i32, i32, i32) {
    %c1_i32 = arith.constant 1 : i32
    %0 = arith.muli %arg0, %c1_i32 : i32
    %1 = arith.addi %0, %arg2 : i32
    %c0_i32 = arith.constant 0 : i32
    %c0_i32_0 = arith.constant 0 : i32
    return %arg1, %1, %c0_i32 : i32, i32, i32
  }
  func.func @transform_1(%arg0: i32, %arg1: i32, %arg2: i32) -> (i32, i32, i32) {
    %c1_i32 = arith.constant 1 : i32
    %0 = arith.muli %arg0, %c1_i32 : i32
    %1 = arith.addi %0, %arg2 : i32
    %c0_i32 = arith.constant 0 : i32
    %c0_i32_0 = arith.constant 0 : i32
    return %arg1, %1, %c0_i32 : i32, i32, i32
  }
  func.func @transform_2(%arg0: i32, %arg1: i32, %arg2: i32) -> (i32, i32, i32, i32) {
    %c0_i32 = arith.constant 0 : i32
    %c0_i32_0 = arith.constant 0 : i32
    %c0_i32_1 = arith.constant 0 : i32
    return %arg0, %arg1, %c0_i32, %c0_i32_0 : i32, i32, i32, i32
  }
}

</mosaic_0001>

<llo_original>
// kernel: tpu_custom_call.1
$region0: #{tpu_custom_call.1}
  #allocation0 [shape = 'u32[]', space=smem, size = 0x4, offset = 0x4, fixed_abs, tag = 'smem constant byte address 0x4 - core index']
  #allocation1 [shape = 'u32[144,128]{1,0:T(1,128)}', space=vmem, size = 0x12000, scoped, tag = 'internal scratch']
  #allocation2 [shape = 'f32[1,1]{1,0:T(1,128)}', space=vmem, size = 0x200, scoped, tag = 'scratch operand']
  #allocation3 [shape = 'f32[1,1]{1,0:T(1,128)}', space=vmem, size = 0x200, scoped, tag = 'scratch operand']
  %s0 = inlined_call_operand.vmem [shape: f32[2,1,32], index: 0, kind: input, shape index: {}]
  %s1 = inlined_call_operand.vmem [shape: s8[2,1,32], index: 1, kind: input, shape index: {}]
  %s2 = inlined_call_operand.hbm [shape: f32[1,2,2,128], index: 2, kind: output, shape index: {}]
  %s3 = sld [smem:[#allocation0]]
  $region49: #{tpu_custom_call.1} parent=0
    _
  %s5 = ssub.s32 1, %s3
  %s6 = scalar_select 0, %s5, %s3
  $region1: #{tpu_custom_call.1} parent=0
    #allocation4 [shape = 'u8[2048]{0}', space=vmem, size = 0x800, scoped, tag = 'output window, operand 0']
    #allocation5 [shape = 's32[2]{0}', space=sflag, size = 0x8, scoped, tag = 'scoped memory for tpu_custom_call.1']
    %7 = vsyncpa [#allocation5], 0
    %s8 = scalar_lea.sflag [#allocation5], 1
    %9 = vsyncpa %s8, 0
    loop: start=0, step=1, limit=4
    $region2: #{tpu_custom_call.1} parent=1 // loop_pre_header
      _
    $region3: #{tpu_custom_call.1} parent=1 // loop_header
      %s11 = sphi 0, %s15
      %p12 = scmp.ge.s32.totalorder %s11, 4
      %s18 = sphi 0, %s37
      %s19 = sphi 0, %s33
      %s20 = sphi 0, %s29
      %s21 = sphi 0, %s18
      %s22 = sphi 0, %s19
      %s23 = sphi 0, %s20
      %s24 = sphi 0, %s21
      %s25 = sphi 0, %s22
      %s26 = sphi 0, %s23
      %s44 = sphi 0, %s46
      %s47 = sphi 0, %s44
      %s48 = sphi 0, %s47
      %s64 = sphi 0, %s48
      %s74 = sphi 0, %s76
      %s77 = sphi 0, %s74
      %s78 = sphi 0, %s77
      %s94 = sphi 0, %s78
      %s102 = sphi 0, %s104
      %s105 = sphi 0, %s102
      %s106 = sphi 0, %s105
      %s122 = sphi 0, %s106
    $region4: #{tpu_custom_call.1} parent=1 // loop_header_branch
      %14 = sbr.rel (%p12) target = $region8
    $region5: #{tpu_custom_call.1} parent=1 // loop_body
      %s16 = ssub.s32 %s11, 1
      %s17 = ssub.s32 %s11, 2
      %s27 = sadd.s32 1, %s20
      %p28 = scmp.ge.s32.totalorder %s27, 1
      %s29 = scalar_select %p28, 0, %s27
      %s30 = sadd.s32 1, %s19
      %s31 = scalar_select %p28, %s30, %s19
      %p32 = scmp.ge.s32.totalorder %s31, 2
      %s33 = scalar_select %p32, 0, %s31
      %s34 = sadd.s32 1, %s18
      %s35 = scalar_select %p32, %s34, %s18
      %p36 = scmp.ge.s32.totalorder %s35, 1
      %s37 = scalar_select %p36, 0, %s35
      %s38 = sadd.s32 %s18, %s20
      %s39 = sadd.s32 %s37, %s29
      %s40 = ssub.s32 %s19, %s33
      %s41 = ssub.s32 %s38, %s39
      %s42 = sor.u32 %s40, %s41
      %p43 = scmp.eq.s32.totalorder %s42, 0
      %s45 = sadd.s32 %s44, 1
      %s46 = scalar_select %p43, %s44, %s45
      %p49 = pneg %p43
      %p50 = scmp.eq.s32.totalorder %s11, 1
      %p51 = por %p49, %p50
      %p52 = scmp.ne.s32.totalorder %s44, %s47
      %p53 = scmp.eq.s32.totalorder %s11, 0
      %p54 = por %p52, %p53
      %p55 = scmp.ne.s32.totalorder %s44, %s47
      %p56 = scmp.eq.s32.totalorder %s16, 1
      %p57 = por %p55, %p56
      %p58 = scmp.ne.s32.totalorder %s47, %s48
      %p59 = scmp.eq.s32.totalorder %s16, 0
      %p60 = por %p58, %p59
      %p61 = scmp.ne.s32.totalorder %s47, %s48
      %p62 = scmp.eq.s32.totalorder %s17, 1
      %p63 = por %p61, %p62
      %p65 = scmp.ne.s32.totalorder %s48, %s64
      %p66 = scmp.eq.s32.totalorder %s17, 0
      %p67 = por %p65, %p66
      %s68 = sadd.s32 %s18, %s20
      %s69 = sadd.s32 %s37, %s29
      %s70 = ssub.s32 %s19, %s33
      %s71 = ssub.s32 %s68, %s69
      %s72 = sor.u32 %s70, %s71
      %p73 = scmp.eq.s32.totalorder %s72, 0
      %s75 = sadd.s32 %s74, 1
      %s76 = scalar_select %p73, %s74, %s75
      %p79 = pneg %p73
      %p80 = scmp.eq.s32.totalorder %s11, 1
      %p81 = por %p79, %p80
      %p82 = scmp.ne.s32.totalorder %s74, %s77
      %p83 = scmp.eq.s32.totalorder %s11, 0
      %p84 = por %p82, %p83
      %p85 = scmp.ne.s32.totalorder %s74, %s77
      %p86 = scmp.eq.s32.totalorder %s16, 1
      %p87 = por %p85, %p86
      %p88 = scmp.ne.s32.totalorder %s77, %s78
      %p89 = scmp.eq.s32.totalorder %s16, 0
      %p90 = por %p88, %p89
      %p91 = scmp.ne.s32.totalorder %s77, %s78
      %p92 = scmp.eq.s32.totalorder %s17, 1
      %p93 = por %p91, %p92
      %p95 = scmp.ne.s32.totalorder %s78, %s94
      %p96 = scmp.eq.s32.totalorder %s17, 0
      %p97 = por %p95, %p96
      %s98 = ssub.s32 %s18, %s37
      %s99 = ssub.s32 %s19, %s33
      %s100 = sor.u32 %s98, %s99
      %p101 = scmp.eq.s32.totalorder %s100, 0
      %s103 = sadd.s32 %s102, 1
      %s104 = scalar_select %p101, %s102, %s103
      %p107 = pneg %p101
      %p108 = scmp.eq.s32.totalorder %s11, 1
      %p109 = por %p107, %p108
      %p110 = scmp.ne.s32.totalorder %s102, %s105
      %p111 = scmp.eq.s32.totalorder %s11, 0
      %p112 = por %p110, %p111
      %p113 = scmp.ne.s32.totalorder %s102, %s105
      %p114 = scmp.eq.s32.totalorder %s16, 1
      %p115 = por %p113, %p114
      %p116 = scmp.ne.s32.totalorder %s105, %s106
      %p117 = scmp.eq.s32.totalorder %s16, 0
      %p118 = por %p116, %p117
      %p119 = scmp.ne.s32.totalorder %s105, %s106
      %p120 = scmp.eq.s32.totalorder %s17, 1
      %p121 = por %p119, %p120
      %p123 = scmp.ne.s32.totalorder %s106, %s122
      %p124 = scmp.eq.s32.totalorder %s17, 0
      %p125 = por %p123, %p124
      %p126 = scmp.le.s32.totalorder 1, %s11
      %p127 = scmp.lt.s32.totalorder %s11, 3
      %p128 = pnand %p126, %p127
      %p129 = pneg %p128
      // Predicated region
      $region9: #{tpu_custom_call.1} parent=5 // pred_check
        _
      $region10: #{tpu_custom_call.1} parent=5 // pred_check_branch
        %131 = sbr.rel (%p128) target = $region12
      $region11: #{tpu_custom_call.1} parent=5 // pred_region
        %s132 = ssub.s32 %s11, 1
      $region12: #{tpu_custom_call.1} parent=5 // pred_fallthru
        _
      %p133 = scmp.lt.s32.totalorder %s11, 2
      // Predicated region
      $region13: #{tpu_custom_call.1} parent=5 // pred_check
        %p134 = pneg %p133
      $region14: #{tpu_custom_call.1} parent=5 // pred_check_branch
        %136 = sbr.rel (%p134) target = $region16
      $region15: #{tpu_custom_call.1} parent=5 // pred_region
        // Predicated region
        $region17: #{tpu_custom_call.1} parent=15 // pred_check
          %p137 = pneg %p54
        $region18: #{tpu_custom_call.1} parent=15 // pred_check_branch
          %139 = sbr.rel (%p137) target = $region20
        $region19: #{tpu_custom_call.1} parent=15 // pred_region
          %s140 = sadd.s32 %s18, %s20
          %p141 = scmp.lt.s32.totalorder %s19, 1
          %s142 = scalar_select %p141, %s19, 1
          %p143 = scmp.lt.s32.totalorder %s140, 0
          %s144 = scalar_select %p143, %s140, 0
          %s145 = sadd.s32 %s144, %s142
          %s146 = scalar_lea.vmem %s0, %s145
          %s147 = sadd.s32 %s18, %s20
        $region20: #{tpu_custom_call.1} parent=15 // pred_fallthru
          _
        // Predicated region
        $region21: #{tpu_custom_call.1} parent=15 // pred_check
          %p148 = pneg %p84
        $region22: #{tpu_custom_call.1} parent=15 // pred_check_branch
          %150 = sbr.rel (%p148) target = $region24
        $region23: #{tpu_custom_call.1} parent=15 // pred_region
          %s151 = sadd.s32 %s18, %s20
          %p152 = scmp.lt.s32.totalorder %s19, 1
          %s153 = scalar_select %p152, %s19, 1
          %p154 = scmp.lt.s32.totalorder %s151, 0
          %s155 = scalar_select %p154, %s151, 0
          %s156 = sadd.s32 %s155, %s153
          %s157 = scalar_lea.vmem %s1, %s156
          %s158 = sadd.s32 %s18, %s20
        $region24: #{tpu_custom_call.1} parent=15 // pred_fallthru
          _
      $region16: #{tpu_custom_call.1} parent=5 // pred_fallthru
        _
      %p159 = scmp.le.s32.totalorder 1, %s11
      %p160 = scmp.lt.s32.totalorder %s11, 3
      %p161 = pnand %p159, %p160
      %p162 = pneg %p161
      // Predicated region
      $region25: #{tpu_custom_call.1} parent=5 // pred_check
        _
      $region26: #{tpu_custom_call.1} parent=5 // pred_check_branch
        %164 = sbr.rel (%p161) target = $region28
      $region27: #{tpu_custom_call.1} parent=5 // pred_region
        %s165 = ssub.s32 %s11, 1
        %s166 = sadd.s32 %s21, %s23
        %p167 = scmp.lt.s32.totalorder %s22, 1
        %s168 = scalar_select %p167, %s22, 1
        %p169 = scmp.lt.s32.totalorder %s166, 0
        %s170 = scalar_select %p169, %s166, 0
        %s171 = sadd.s32 %s170, %s168
        %s172 = scalar_lea.vmem %s0, %s171
        %p173 = pneg %p60
        %p174 = pneg %p57
        %s175 = sadd.s32 %s21, %s23
        %p176 = scmp.lt.s32.totalorder %s22, 1
        %s177 = scalar_select %p176, %s22, 1
        %p178 = scmp.lt.s32.totalorder %s175, 0
        %s179 = scalar_select %p178, %s175, 0
        %s180 = sadd.s32 %s179, %s177
        %s181 = scalar_lea.vmem %s1, %s180
        %p182 = pneg %p90
        %p183 = pneg %p87
        %p184 = pneg %p118
        %p185 = pneg %p115
        %s186 = sand.u32 %s105, 1
        %s187 = scalar_lea.sflag [#allocation5], %s186
        %s188 = sand.u32 %s105, 1
        %s189 = smul.addr %s188, 2
        %s190 = scalar_lea.vmem [#allocation4], %s189
        %s191 = sadd.s32 %s21, %s23
        %p192 = scmp.lt.s32.totalorder %s22, 1
        %s193 = scalar_select %p192, %s22, 1
        %p194 = scmp.lt.s32.totalorder %s191, 0
        %s195 = scalar_select %p194, %s191, 0
        %s196 = sadd.s32 %s195, %s193
        %s197 = scalar_lea.vmem %s0, %s196
        %s198 = sadd.s32 %s21, %s23
        %s199 = sadd.s32 %s21, %s23
        %p200 = scmp.lt.s32.totalorder %s22, 1
        %s201 = scalar_select %p200, %s22, 1
        %p202 = scmp.lt.s32.totalorder %s199, 0
        %s203 = scalar_select %p202, %s199, 0
        %s204 = sadd.s32 %s203, %s201
        %s205 = scalar_lea.vmem %s1, %s204
        %s206 = sadd.s32 %s21, %s23
        %p207 = scmp.eq.s32.totalorder %s23, 0
        // Predicated region
        $region29: #{tpu_custom_call.1} parent=27 // pred_check
          %p208 = pneg %p207
        $region30: #{tpu_custom_call.1} parent=27 // pred_check_branch
          %210 = sbr.rel (%p208) target = $region32
        $region31: #{tpu_custom_call.1} parent=27 // pred_region
          %vm211 = vcmask 0
          %212 = vst.msk [vmem:[#allocation2] sm:$0x1] %vm211, 0.0
          %213 = vst.msk [vmem:[#allocation3] sm:$0x1] %vm211, 0.0
        $region32: #{tpu_custom_call.1} parent=27 // pred_fallthru
          _
        %v214 = vld [vmem:[%s197] sm:$0x1]
        %v215 = vld [vmem:[%s205] sm:$0x1]
        %v216 = vunpack.c.0.s8 %v215
        %v217 = vlaneseq
        %v218 = vand.u32 %v217, 127
        %vm219 = vcmp.lt.s32.totalorder %v218, 0
        %v220 = vsub.s32 0, %v218
        %v221 = vsel %vm219, %v220, %v218
        %v222 = vshrl.u32 %v221, 2
        %v223 = vand.u32 %v221, 3
        %v224 = vsub.s32 0, %v223
        %v225 = vsel %vm219, %v224, %v223
        %vm226 = vcmp.ne.s32.totalorder %v225, 0
        %vm227 = vcmp.lt.s32.totalorder %v225, 0
        %vm228 = vmand %vm227, %vm226
        %v229 = vadd.s32 %v225, 4
        %v230 = vsel %vm228, %v229, %v225
        %v231 = vsub.s32 %v216, 1
        %vm232 = vcmp.eq.s32.totalorder %v231, %v230
        %vm233 = vcmp.gt.s32.totalorder %v216, 4294967295
        %v234 = vand.u32 2147483647, %v214
        %v235 = vsub.f32 0.0, %v234
        %v236 = vmul.f32 %v235, 1.442695
        %v237 = vpow.pop %v236
        %v238 = vadd.f32 %v237, 1.0
        %v239 = vlog2.pop %v238
        %v240 = vmul.f32 %v239, 0.6931472
        %v241 = vmul.f32 -0.5, %v237
        %v242 = vadd.f32 %v241, 1.0
        %v243 = vmul.f32 %v242, %v237
        %v244 = vand.u32 2147483647, %v237
        %vm245 = vcmp.lt.f32.partialorder %v244, 0.0004427343
        %v246 = vsel %vm245, %v243, %v240
        %v247 = vadd.f32 %v237, 1.0
        %v248 = vrcp.pop %v247
        %v249 = vmul.f32 1.0, %v248
        %vm250 = vcmp.ge.f32.partialorder %v214, 0.0
        %v251 = vsub.f32 1.0, %v249
        %v252 = vsel %vm250, %v249, %v251
        %v253 = vsub.f32 1.0, %v252
        %v254 = vmul.f32 %v253, %v253
        %v255 = vmul.f32 %v252, %v252
        %v256 = vmax.f32 %v214, 0.0
        %v257 = vmul.f32 %v254, 0.25
        %v258 = vsub.f32 %v256, %v214
        %v259 = vadd.f32 %v258, %v246
        %v260 = vmul.f32 %v257, %v259
        %v261 = vmul.f32 %v255, 0.75
        %v262 = vadd.f32 %v256, %v246
        %v263 = vmul.f32 %v261, %v262
        %v264 = vsel %vm232, %v260, %v263
        %v265 = vsel %vm233, %v264, 0.0
        %vm266 = vmand %vm232, %vm233
        %v267 = vld [vmem:[#allocation2] sm:$0x1]
        %vm268 = vcmask 253952
        %v269 = vsel %vm268, %v265, 0.0
        %270 = vadd.xlane.f32.xlu0 %v269
        %v271 = vpop.xlane.xlu0 %270
        %v272 = vrot.slane %v271, 4
        %v273 = vadd.f32 %v271, %v272
        %v274 = vrot.slane %v273, 2
        %v275 = vadd.f32 %v273, %v274
        %v276 = vrot.slane %v275, 1
        %v277 = vadd.f32 %v275, %v276
        %s278 = vtos %v277
        %v279 = vstv %s278
        %v280 = vadd.f32 %v267, %v279
        %vm281 = vcmask 0
        %282 = vst.msk [vmem:[#allocation2] sm:$0x1] %vm281, %v280
        %v283 = vld [vmem:[#allocation3] sm:$0x1]
        %v284 = vsel %vm266, 1, 0
        %v285 = vcvt.s32.f32 %v284
        %v286 = vsel %vm268, %v285, 0.0
        %287 = vadd.xlane.f32.xlu0 %v286
        %v288 = vpop.xlane.xlu0 %287
        %v289 = vrot.slane %v288, 4
        %v290 = vadd.f32 %v288, %v289
        %v291 = vrot.slane %v290, 2
        %v292 = vadd.f32 %v290, %v291
        %v293 = vrot.slane %v292, 1
        %v294 = vadd.f32 %v292, %v293
        %s295 = vtos %v294
        %v296 = vstv %s295
        %v297 = vadd.f32 %v283, %v296
        %298 = vst.msk [vmem:[#allocation3] sm:$0x1] %vm281, %v297
        // Predicated region
        $region33: #{tpu_custom_call.1} parent=27 // pred_check
          %p299 = pneg %p207
        $region34: #{tpu_custom_call.1} parent=27 // pred_check_branch
          %301 = sbr.rel (%p299) target = $region36
        $region35: #{tpu_custom_call.1} parent=27 // pred_region
          %v302 = vlaneseq
          %v303 = vshrl.u32 %v302, 7
          %vm304 = vcmp.eq.s32.totalorder %v303, 0
          %v305 = vld [vmem:[#allocation2] sm:$0x1]
          %v306 = vld [vmem:[#allocation3] sm:$0x1]
          %v308 = vlaneseq
          %v309 = vshrl.u32 %v308, 7
          %v310 = vsub.s32 0, %v309
          %v311 = vrot.slane %v305, %v310
          %312 = vset.pattern.permute.xlu0 0
          %313 = vperm.xlu0 %312, %v311
          %v314 = vpop.permute.xlu0 %313
          %v317 = vlaneseq
          %v318 = vshrl.u32 %v317, 7
          %v319 = vsub.s32 0, %v318
          %v320 = vrot.slane %v306, %v319
          %321 = vset.pattern.permute.xlu0 0
          %322 = vperm.xlu0 %321, %v320
          %v323 = vpop.permute.xlu0 %322
          %v325 = vsel %vm304, %v314, %v323
          %326 = vst [vmem:[%s190] sm:$0x3] %v325
        $region36: #{tpu_custom_call.1} parent=27 // pred_fallthru
          _
        %s327 = sand.u32 %s105, 1
        %s328 = scalar_lea.sflag [#allocation5], %s327
        %s329 = sand.u32 %s105, 1
        %s330 = smul.addr %s329, 2
        %s331 = scalar_lea.vmem [#allocation4], %s330
        // Predicated region
        $region37: #{tpu_custom_call.1} parent=27 // pred_check
          %p332 = pneg %p115
        $region38: #{tpu_custom_call.1} parent=27 // pred_check_branch
          %334 = sbr.rel (%p332) target = $region40
        $region39: #{tpu_custom_call.1} parent=27 // pred_region
          %s336 = ssub.s32 32, 32
          %337 = vsyncadd %s328, %s336
          %s338 = smul.addr %s21, 2
          %s339 = sadd.s32 %s22, %s338
          %s340 = smul.addr %s339, 32
          %s341 = scalar_lea.hbm %s2, %s340
          %s343 = sshll.u32 %s331, 4
          %s344 = int_to_ptr.vmem [resolvable:$true] %s343
          %346 = dma.vmem_to_hbm [thread:$0]  %s344, 32, %s341, %s328
        $region40: #{tpu_custom_call.1} parent=27 // pred_fallthru
          _
      $region28: #{tpu_custom_call.1} parent=5 // pred_fallthru
        _
      %p347 = scmp.le.s32.totalorder 2, %s11
      // Predicated region
      $region41: #{tpu_custom_call.1} parent=5 // pred_check
        %p348 = pneg %p347
      $region42: #{tpu_custom_call.1} parent=5 // pred_check_branch
        %350 = sbr.rel (%p348) target = $region44
      $region43: #{tpu_custom_call.1} parent=5 // pred_region
        %s351 = ssub.s32 %s11, 2
        // Predicated region
        $region45: #{tpu_custom_call.1} parent=43 // pred_check
          %p352 = pneg %p121
        $region46: #{tpu_custom_call.1} parent=43 // pred_check_branch
          %354 = sbr.rel (%p352) target = $region48
        $region47: #{tpu_custom_call.1} parent=43 // pred_region
          %s355 = sand.u32 %s106, 1
          %s356 = scalar_lea.sflag [#allocation5], %s355
          %s357 = sand.u32 %s106, 1
          %s358 = smul.addr %s357, 2
          %s359 = scalar_lea.vmem [#allocation4], %s358
          %360 = dma.done %s356, 32
        $region48: #{tpu_custom_call.1} parent=43 // pred_fallthru
          _
      $region44: #{tpu_custom_call.1} parent=5 // pred_fallthru
        _
    $region6: #{tpu_custom_call.1} parent=1 // loop_footer
      %s15 = sadd.s32 1, %s11
    $region7: #{tpu_custom_call.1} parent=1 // loop_footer_branch
      %10 = sbr.rel target = $region3
    $region8: #{tpu_custom_call.1} parent=1 // loop_exit
      _
    %361 = vsyncpa [#allocation5], 1
    %s362 = scalar_lea.sflag [#allocation5], 1
    %363 = vsyncpa %s362, 1

</llo_original>
